<compile_context>
chip_gen: v6e
topology: v6e:2x2x1
jax: 0.10.0
libtpu: 0.0.40
codegen_flags: <defaults>
</compile_context>

<pallas_src>
import jax
import jax.numpy as jnp
from jax.experimental import pallas as pl
from jax.experimental.pallas import tpu as pltpu

LANES = 128  # vreg lane width; output slab is padded to this


def _critic_v_kernel(x_ref, w1_ref, b1_ref, w2_ref, b2_ref, w3_ref, b3_ref, o_ref):
    # x:  (TB, D)  f32            w1: (D, H) bf16   b1: (1, H)   f32
    # w2: (H, H)   bf16           b2: (1, H) f32
    # w3: (H, 128) bf16 (cols>0 are zero-padding)   b3: (1, 128) f32
    # o:  (TB, 128) f32 lane-dense slab; column 0 holds V
    x = x_ref[...].astype(jnp.bfloat16)
    h1 = jnp.dot(x, w1_ref[...], preferred_element_type=jnp.float32) + b1_ref[...]
    h1 = jnp.maximum(h1, 0.0).astype(jnp.bfloat16)
    h2 = jnp.dot(h1, w2_ref[...], preferred_element_type=jnp.float32) + b2_ref[...]
    h2 = jnp.maximum(h2, 0.0).astype(jnp.bfloat16)
    v = jnp.dot(h2, w3_ref[...], preferred_element_type=jnp.float32) + b3_ref[...]
    o_ref[...] = v.astype(o_ref.dtype)


def _round_up(n, m):
    return ((n + m - 1) // m) * m


def critic_v_forward(state, params, *, tb=256):
    """state: (B, n_states). Returns V: (B, 1) float32."""
    w1, b1, w2, b2, w3p, b3p = params
    B, D = state.shape
    H = w1.shape[1]

    x = state.astype(jnp.float32)
    # Batch tile: multiple of 8 sublanes; cap at `tb` (kept small enough that
    # double-buffered x/out blocks sit well under v7x's 64 MiB VMEM).
    TB = min(tb, _round_up(B, 8))
    Bp = _round_up(B, TB)
    if Bp != B:
        x = jnp.pad(x, ((0, Bp - B), (0, 0)))

    out = pl.pallas_call(
        _critic_v_kernel,
        out_shape=jax.ShapeDtypeStruct((Bp, LANES), jnp.float32),
        grid=(Bp // TB,),
        in_specs=[
            pl.BlockSpec((TB, D), lambda i: (i, 0)),      # x: tiled over batch
            pl.BlockSpec((D, H), lambda i: (0, 0)),       # weights/biases stay
            pl.BlockSpec((1, H), lambda i: (0, 0)),       # VMEM-resident across
            pl.BlockSpec((H, H), lambda i: (0, 0)),       # the batch grid
            pl.BlockSpec((1, H), lambda i: (0, 0)),
            pl.BlockSpec((H, LANES), lambda i: (0, 0)),
            pl.BlockSpec((1, LANES), lambda i: (0, 0)),
        ],
        out_specs=pl.BlockSpec((TB, LANES), lambda i: (i, 0)),
        compiler_params=pltpu.CompilerParams(
            dimension_semantics=("parallel",),            # megacore split on v7x
            vmem_limit_bytes=64 * 1024 * 1024,
        ),
    )(x, w1, b1, w2, b2, w3p, b3p)

    return out[:B, :1]


# ---------------- deterministic parameter init (mirrors reset_parameters) -------------

def _orthogonal(key, out_features, in_features, gain=1.0):
    """Equivalent of nn.init.orthogonal_(weight, gain) for a (out, in) matrix."""
    rows, cols = out_features, in_features
    a = jax.random.normal(key, (max(rows, cols), min(rows, cols)), dtype=jnp.float32)
    q, r = jnp.linalg.qr(a)
    q = q * jnp.sign(jnp.diagonal(r))          # make decomposition unique
    if rows < cols:
        q = q.T
    return gain * q[:rows, :cols]


def init_critic_v_params(key, n_states, hidden_size, std=1.0, bias_const=1e-6):
    k1, k2, k3 = jax.random.split(key, 3)
    # torch Linear weight is (out, in); store transposed (in, out), bf16, for the kernel.
    w1 = _orthogonal(k1, hidden_size, n_states, std).T.astype(jnp.bfloat16)   # (D, H)
    w2 = _orthogonal(k2, hidden_size, hidden_size, std).T.astype(jnp.bfloat16)  # (H, H)
    w3 = _orthogonal(k3, 1, hidden_size, std).T.astype(jnp.bfloat16)          # (H, 1)
    # Lane-dense padding for the output head: (H, 128) with real weights in col 0.
    w3p = jnp.zeros((hidden_size, LANES), jnp.bfloat16).at[:, :1].set(w3)
    b1 = jnp.full((1, hidden_size), bias_const, jnp.float32)
    b2 = jnp.full((1, hidden_size), bias_const, jnp.float32)
    b3p = jnp.zeros((1, LANES), jnp.float32).at[0, 0].set(bias_const)
    return (w1, b1, w2, b2, w3p, b3p)


if __name__ == "__main__":
    key = jax.random.PRNGKey(0)
    k_state, k_params = jax.random.split(key, 2)

    batch = 16
    n_states = 12
    hidden_size = 128   # lane-aligned hidden (multiple of 128); arbitrary H also works

    state = jax.random.normal(k_state, (batch, n_states), dtype=jnp.float32)
    params = init_critic_v_params(k_params, n_states, hidden_size)

    v = critic_v_forward(state, params)
    v = jax.block_until_ready(v)

    # Reference in plain JAX using the same bf16-weight / f32-accumulate math.
    w1, b1, w2, b2, w3p, b3p = params
    xb = state.astype(jnp.bfloat16)
    r1 = jnp.maximum(jnp.dot(xb, w1, preferred_element_type=jnp.float32) + b1, 0.0)
    r2 = jnp.maximum(
        jnp.dot(r1.astype(jnp.bfloat16), w2, preferred_element_type=jnp.float32) + b2, 0.0
    )
    ref = (jnp.dot(r2.astype(jnp.bfloat16), w3p, preferred_element_type=jnp.float32)
           + b3p)[:, :1]

    assert v.shape == (batch, 1)
    assert jnp.allclose(v, ref, atol=1e-2, rtol=1e-2), "mismatch vs reference"

    print("KERNEL_OK")
</pallas_src>

<mosaic_0001>
module attributes {stable_mosaic.version = 11 : i64} {
  func.func @_critic_v_kernel(%arg0: i32, %arg1: memref<16x12xf32, #tpu.memory_space<vmem>>, %arg2: memref<12x128xbf16, #tpu.memory_space<vmem>>, %arg3: memref<1x128xf32, #tpu.memory_space<vmem>>, %arg4: memref<128x128xbf16, #tpu.memory_space<vmem>>, %arg5: memref<1x128xf32, #tpu.memory_space<vmem>>, %arg6: memref<128x128xbf16, #tpu.memory_space<vmem>>, %arg7: memref<1x128xf32, #tpu.memory_space<vmem>>, %arg8: memref<16x128xf32, #tpu.memory_space<vmem>>) attributes {dimension_semantics = [#tpu.dimension_semantics<parallel>], iteration_bounds = array<i64: 1>, scalar_prefetch = 0 : i64, scratch_operands = 0 : i64, tpu.core_type = #tpu.core_type<tc>, window_params = [{transform_indices = @transform_0, window_bounds = array<i64: 16, 12>}, {pipeline_mode = #tpu.pipeline_mode<synchronous>, transform_indices = @transform_1, window_bounds = array<i64: 12, 128>}, {pipeline_mode = #tpu.pipeline_mode<synchronous>, transform_indices = @transform_2, window_bounds = array<i64: 1, 128>}, {pipeline_mode = #tpu.pipeline_mode<synchronous>, transform_indices = @transform_3, window_bounds = array<i64: 128, 128>}, {pipeline_mode = #tpu.pipeline_mode<synchronous>, transform_indices = @transform_4, window_bounds = array<i64: 1, 128>}, {pipeline_mode = #tpu.pipeline_mode<synchronous>, transform_indices = @transform_5, window_bounds = array<i64: 128, 128>}, {pipeline_mode = #tpu.pipeline_mode<synchronous>, transform_indices = @transform_6, window_bounds = array<i64: 1, 128>}, {transform_indices = @transform_7, window_bounds = array<i64: 16, 128>}]} {
    %c0 = arith.constant 0 : index
    %c0_0 = arith.constant 0 : index
    %0 = vector.load %arg1[%c0, %c0_0] : memref<16x12xf32, #tpu.memory_space<vmem>>, vector<16x12xf32>
    %1 = arith.truncf %0 : vector<16x12xf32> to vector<16x12xbf16>
    %c0_1 = arith.constant 0 : index
    %c0_2 = arith.constant 0 : index
    %2 = vector.load %arg2[%c0_1, %c0_2] : memref<12x128xbf16, #tpu.memory_space<vmem>>, vector<12x128xbf16>
    %cst = arith.constant dense<0.000000e+00> : vector<16x128xf32>
    %3 = tpu.matmul %1, %2, %cst {dimension_numbers = #tpu.dot_dimension_numbers<[1], [0], [0], [1], [0, 0, 1, 1], [], []>} : vector<16x12xbf16>, vector<12x128xbf16>, vector<16x128xf32> -> vector<16x128xf32>
    %c0_3 = arith.constant 0 : index
    %c0_4 = arith.constant 0 : index
    %4 = vector.load %arg3[%c0_3, %c0_4] : memref<1x128xf32, #tpu.memory_space<vmem>>, vector<1x128xf32>
    %5 = vector.broadcast %4 : vector<1x128xf32> to vector<16x128xf32>
    %6 = arith.addf %3, %5 : vector<16x128xf32>
    %cst_5 = arith.constant 0.000000e+00 : f32
    %7 = vector.broadcast %cst_5 : f32 to vector<16x128xf32>
    %8 = arith.maximumf %6, %7 : vector<16x128xf32>
    %9 = arith.truncf %8 : vector<16x128xf32> to vector<16x128xbf16>
    %c0_6 = arith.constant 0 : index
    %c0_7 = arith.constant 0 : index
    %10 = vector.load %arg4[%c0_6, %c0_7] : memref<128x128xbf16, #tpu.memory_space<vmem>>, vector<128x128xbf16>
    %cst_8 = arith.constant dense<0.000000e+00> : vector<16x128xf32>
    %11 = tpu.matmul %9, %10, %cst_8 {dimension_numbers = #tpu.dot_dimension_numbers<[1], [0], [0], [1], [0, 0, 1, 1], [], []>} : vector<16x128xbf16>, vector<128x128xbf16>, vector<16x128xf32> -> vector<16x128xf32>
    %c0_9 = arith.constant 0 : index
    %c0_10 = arith.constant 0 : index
    %12 = vector.load %arg5[%c0_9, %c0_10] : memref<1x128xf32, #tpu.memory_space<vmem>>, vector<1x128xf32>
    %13 = vector.broadcast %12 : vector<1x128xf32> to vector<16x128xf32>
    %14 = arith.addf %11, %13 : vector<16x128xf32>
    %cst_11 = arith.constant 0.000000e+00 : f32
    %15 = vector.broadcast %cst_11 : f32 to vector<16x128xf32>
    %16 = arith.maximumf %14, %15 : vector<16x128xf32>
    %17 = arith.truncf %16 : vector<16x128xf32> to vector<16x128xbf16>
    %c0_12 = arith.constant 0 : index
    %c0_13 = arith.constant 0 : index
    %18 = vector.load %arg6[%c0_12, %c0_13] : memref<128x128xbf16, #tpu.memory_space<vmem>>, vector<128x128xbf16>
    %cst_14 = arith.constant dense<0.000000e+00> : vector<16x128xf32>
    %19 = tpu.matmul %17, %18, %cst_14 {dimension_numbers = #tpu.dot_dimension_numbers<[1], [0], [0], [1], [0, 0, 1, 1], [], []>} : vector<16x128xbf16>, vector<128x128xbf16>, vector<16x128xf32> -> vector<16x128xf32>
    %c0_15 = arith.constant 0 : index
    %c0_16 = arith.constant 0 : index
    %20 = vector.load %arg7[%c0_15, %c0_16] : memref<1x128xf32, #tpu.memory_space<vmem>>, vector<1x128xf32>
    %21 = vector.broadcast %20 : vector<1x128xf32> to vector<16x128xf32>
    %22 = arith.addf %19, %21 : vector<16x128xf32>
    %c0_17 = arith.constant 0 : index
    %c0_18 = arith.constant 0 : index
    %23 = vector.load %arg8[%c0_17, %c0_18] : memref<16x128xf32, #tpu.memory_space<vmem>>, vector<16x128xf32>
    tpu.vector_store %arg8[%c0_17, %c0_18], %22 {strides = array<i32>} : memref<16x128xf32, #tpu.memory_space<vmem>>, vector<16x128xf32>,
    return
  }
  func.func @transform_0(%arg0: i32) -> (i32, i32) {
    %c0_i32 = arith.constant 0 : i32
    %c0_i32_0 = arith.constant 0 : i32
    return %arg0, %c0_i32 : i32, i32
  }
  func.func @transform_1(%arg0: i32) -> (i32, i32) {
    %c0_i32 = arith.constant 0 : i32
    %c0_i32_0 = arith.constant 0 : i32
    %c0_i32_1 = arith.constant 0 : i32
    return %c0_i32, %c0_i32_0 : i32, i32
  }
  func.func @transform_2(%arg0: i32) -> (i32, i32) {
    %c0_i32 = arith.constant 0 : i32
    %c0_i32_0 = arith.constant 0 : i32
    %c0_i32_1 = arith.constant 0 : i32
    return %c0_i32, %c0_i32_0 : i32, i32
  }
  func.func @transform_3(%arg0: i32) -> (i32, i32) {
    %c0_i32 = arith.constant 0 : i32
    %c0_i32_0 = arith.constant 0 : i32
    %c0_i32_1 = arith.constant 0 : i32
    return %c0_i32, %c0_i32_0 : i32, i32
  }
  func.func @transform_4(%arg0: i32) -> (i32, i32) {
    %c0_i32 = arith.constant 0 : i32
    %c0_i32_0 = arith.constant 0 : i32
    %c0_i32_1 = arith.constant 0 : i32
    return %c0_i32, %c0_i32_0 : i32, i32
  }
  func.func @transform_5(%arg0: i32) -> (i32, i32) {
    %c0_i32 = arith.constant 0 : i32
    %c0_i32_0 = arith.constant 0 : i32
    %c0_i32_1 = arith.constant 0 : i32
    return %c0_i32, %c0_i32_0 : i32, i32
  }
  func.func @transform_6(%arg0: i32) -> (i32, i32) {
    %c0_i32 = arith.constant 0 : i32
    %c0_i32_0 = arith.constant 0 : i32
    %c0_i32_1 = arith.constant 0 : i32
    return %c0_i32, %c0_i32_0 : i32, i32
  }
  func.func @transform_7(%arg0: i32) -> (i32, i32) {
    %c0_i32 = arith.constant 0 : i32
    %c0_i32_0 = arith.constant 0 : i32
    return %arg0, %c0_i32 : i32, i32
  }
}

</mosaic_0001>

<llo_original>
// kernel: tpu_custom_call.1
$region0: #{tpu_custom_call.1}
  #allocation0 [shape = 'u32[]', space=smem, size = 0x4, offset = 0x4, fixed_abs, tag = 'smem constant byte address 0x4 - core index']
  #allocation1 [shape = 'u32[144,128]{1,0:T(1,128)}', space=vmem, size = 0x12000, scoped, tag = 'internal scratch']
  %s0 = inlined_call_operand.hbm [shape: f32[16,12], index: 0, kind: input, shape index: {}]
  %s1 = inlined_call_operand.hbm [shape: bf16[12,128], index: 1, kind: input, shape index: {}]
  %s2 = inlined_call_operand.vmem [shape: f32[1,128], index: 2, kind: input, shape index: {}]
  %s3 = inlined_call_operand.hbm [shape: bf16[128,128], index: 3, kind: input, shape index: {}]
  %s4 = inlined_call_operand.vmem [shape: f32[1,128], index: 4, kind: input, shape index: {}]
  %s5 = inlined_call_operand.hbm [shape: bf16[128,128], index: 5, kind: input, shape index: {}]
  %s6 = inlined_call_operand.vmem [shape: f32[1,128], index: 6, kind: input, shape index: {}]
  %s7 = inlined_call_operand.hbm [shape: f32[16,128], index: 7, kind: output, shape index: {}]
  %s8 = sld [smem:[#allocation0]]
  $region54: #{tpu_custom_call.1} parent=0
    _
  %s10 = ssub.s32 1, %s8
  %s11 = scalar_select 0, %s10, %s8
  $region1: #{tpu_custom_call.1} parent=0
    #allocation2 [shape = 'u8[8192]{0}', space=vmem, size = 0x2000, scoped, tag = 'input window, operand 0, single buffered']
    #allocation3 [shape = 's32[1]{0}', space=sflag, size = 0x4, scoped, tag = 'scoped memory for tpu_custom_call.1']
    #allocation4 [shape = 's32[1]{0}', space=sflag, size = 0x4, scoped, tag = 'scoped memory for tpu_custom_call.1']
    #allocation5 [shape = 'u8[4096]{0}', space=vmem, size = 0x1000, scoped, tag = 'input window, operand 1, single buffered']
    #allocation6 [shape = 's32[1]{0}', space=sflag, size = 0x4, scoped, tag = 'scoped memory for tpu_custom_call.1']
    #allocation7 [shape = 'u8[32768]{0}', space=vmem, size = 0x8000, scoped, tag = 'input window, operand 3, single buffered']
    #allocation8 [shape = 'u8[32768]{0}', space=vmem, size = 0x8000, scoped, tag = 'input window, operand 5, single buffered']
    #allocation9 [shape = 's32[1]{0}', space=sflag, size = 0x4, scoped, tag = 'scoped memory for tpu_custom_call.1']
    #allocation10 [shape = 'u8[8192]{0}', space=vmem, size = 0x2000, scoped, tag = 'output window, operand 0, single buffered']
    %12 = vsyncpa [#allocation3], 0
    %13 = vsyncpa [#allocation6], 0
    %14 = vsyncpa [#allocation9], 0
    %15 = vsyncpa [#allocation4], 0
    // Predicated region
    $region2: #{tpu_custom_call.1} parent=1 // pred_check
      _
    $region3: #{tpu_custom_call.1} parent=1 // pred_check_branch
      %17 = sbr.rel (0) target = $region5
    $region4: #{tpu_custom_call.1} parent=1 // pred_region
      %s19 = ssub.s32 256, 256
      %20 = vsyncadd [#allocation3], %s19
      %s21 = sshll.u32 [#allocation2], 4
      %s22 = int_to_ptr.vmem [resolvable:$true] %s21
      %27 = dma.hbm_to_vmem [thread:$0]  %s0, 256, %s22, [#allocation3], 128, 128, 8
    $region5: #{tpu_custom_call.1} parent=1 // pred_fallthru
      _
    // Predicated region
    $region6: #{tpu_custom_call.1} parent=1 // pred_check
      _
    $region7: #{tpu_custom_call.1} parent=1 // pred_check_branch
      %29 = sbr.rel (0) target = $region9
    $region8: #{tpu_custom_call.1} parent=1 // pred_region
      %s31 = ssub.s32 128, 128
      %32 = vsyncadd [#allocation6], %s31
      %s33 = sshll.u32 [#allocation5], 4
      %s34 = int_to_ptr.vmem [resolvable:$true] %s33
      %39 = dma.hbm_to_vmem [thread:$0]  %s1, 128, %s34, [#allocation6], 64, 64, 4
    $region9: #{tpu_custom_call.1} parent=1 // pred_fallthru
      _
    // Predicated region
    $region10: #{tpu_custom_call.1} parent=1 // pred_check
      _
    $region11: #{tpu_custom_call.1} parent=1 // pred_check_branch
      %41 = sbr.rel (0) target = $region13
    $region12: #{tpu_custom_call.1} parent=1 // pred_region
      _
    $region13: #{tpu_custom_call.1} parent=1 // pred_fallthru
      _
    // Predicated region
    $region14: #{tpu_custom_call.1} parent=1 // pred_check
      _
    $region15: #{tpu_custom_call.1} parent=1 // pred_check_branch
      %43 = sbr.rel (0) target = $region17
    $region16: #{tpu_custom_call.1} parent=1 // pred_region
      %s45 = ssub.s32 1024, 1024
      %46 = vsyncadd [#allocation6], %s45
      %s47 = sshll.u32 [#allocation7], 4
      %s48 = int_to_ptr.vmem [resolvable:$true] %s47
      %53 = dma.hbm_to_vmem [thread:$0]  %s3, 1024, %s48, [#allocation6], 64, 64, 4
    $region17: #{tpu_custom_call.1} parent=1 // pred_fallthru
      _
    // Predicated region
    $region18: #{tpu_custom_call.1} parent=1 // pred_check
      _
    $region19: #{tpu_custom_call.1} parent=1 // pred_check_branch
      %55 = sbr.rel (0) target = $region21
    $region20: #{tpu_custom_call.1} parent=1 // pred_region
      _
    $region21: #{tpu_custom_call.1} parent=1 // pred_fallthru
      _
    // Predicated region
    $region22: #{tpu_custom_call.1} parent=1 // pred_check
      _
    $region23: #{tpu_custom_call.1} parent=1 // pred_check_branch
      %57 = sbr.rel (0) target = $region25
    $region24: #{tpu_custom_call.1} parent=1 // pred_region
      %s59 = ssub.s32 1024, 1024
      %60 = vsyncadd [#allocation9], %s59
      %s61 = sshll.u32 [#allocation8], 4
      %s62 = int_to_ptr.vmem [resolvable:$true] %s61
      %67 = dma.hbm_to_vmem [thread:$0]  %s5, 1024, %s62, [#allocation9], 64, 64, 4
    $region25: #{tpu_custom_call.1} parent=1 // pred_fallthru
      _
    // Predicated region
    $region26: #{tpu_custom_call.1} parent=1 // pred_check
      _
    $region27: #{tpu_custom_call.1} parent=1 // pred_check_branch
      %69 = sbr.rel (0) target = $region29
    $region28: #{tpu_custom_call.1} parent=1 // pred_region
      _
    $region29: #{tpu_custom_call.1} parent=1 // pred_fallthru
      _
    // Predicated region
    $region30: #{tpu_custom_call.1} parent=1 // pred_check
      _
    $region31: #{tpu_custom_call.1} parent=1 // pred_check_branch
      %71 = sbr.rel (0) target = $region33
    $region32: #{tpu_custom_call.1} parent=1 // pred_region
      %72 = dma.done [#allocation3], 256
    $region33: #{tpu_custom_call.1} parent=1 // pred_fallthru
      _
    // Predicated region
    $region34: #{tpu_custom_call.1} parent=1 // pred_check
      _
    $region35: #{tpu_custom_call.1} parent=1 // pred_check_branch
      %74 = sbr.rel (0) target = $region37
    $region36: #{tpu_custom_call.1} parent=1 // pred_region
      %75 = dma.done [#allocation6], 128
    $region37: #{tpu_custom_call.1} parent=1 // pred_fallthru
      _
    // Predicated region
    $region38: #{tpu_custom_call.1} parent=1 // pred_check
      _
    $region39: #{tpu_custom_call.1} parent=1 // pred_check_branch
      %77 = sbr.rel (0) target = $region41
    $region40: #{tpu_custom_call.1} parent=1 // pred_region
      %78 = dma.done [#allocation6], 1024
    $region41: #{tpu_custom_call.1} parent=1 // pred_fallthru
      _
    // Predicated region
    $region42: #{tpu_custom_call.1} parent=1 // pred_check
      _
    $region43: #{tpu_custom_call.1} parent=1 // pred_check_branch
      %80 = sbr.rel (0) target = $region45
    $region44: #{tpu_custom_call.1} parent=1 // pred_region
      %81 = dma.done [#allocation9], 1024
    $region45: #{tpu_custom_call.1} parent=1 // pred_fallthru
      _
    %v83 = vld [vmem:[#allocation2] sm:$0xff]
    %v84 = vld [vmem:[#allocation2 + $0x8] sm:$0xff]
    %v85 = vpack.c.bf16 %v84, %v83
    %v86 = vld [vmem:[#allocation5] sm:$0xf]
    %v87 = vld [vmem:[#allocation5 + $0x4] sm:$0x3]
    %v88 = vld [vmem:[%s2] sm:$0x1]
    %v90 = vlaneseq
    %v91 = vshrl.u32 %v90, 7
    %v92 = vsub.s32 0, %v91
    %v93 = vrot.slane %v88, %v92
    %v97 = vunpack.c.l.b16 %v86
    %v98 = vunpack.c.l.b16 %v87
    %v99 = vpack.c.b16 %v98, %v97
    %vm100 = vcmask 97280
    %v102 = vsel %vm100, %v85, 0
    %vm104 = vcmask 1045504
    %v106 = vsel %vm104, %v99, 0
    %108 = vmatprep.subr.bf16.mxu0 0
    %109 = vmatpush1.bf16.msra.mxu0 0
    %110 = vmatprep.subr.bf16.mxu0 0
    %111 = vmatpush1.bf16.msra.mxu0 0
    %112 = vmatprep.subr.bf16.mxu0 0
    %113 = vmatpush1.bf16.msra.mxu0 0
    %114 = vmatprep.subr.bf16.mxu0 0
    %115 = vmatpush1.bf16.msra.mxu0 0
    %116 = vmatprep.subr.bf16.mxu0 0
    %117 = vmatpush1.bf16.msra.mxu0 0
    %118 = vmatprep.subr.bf16.mxu0 0
    %119 = vmatpush1.bf16.msra.mxu0 0
    %120 = vmatprep.subr.bf16.mxu0 0
    %121 = vmatpush1.bf16.msra.mxu0 0
    %122 = vmatprep.subr.bf16.mxu0 0
    %123 = vmatpush1.bf16.msra.mxu0 %v106
    %124 = vmatprep.subr.bf16.mxu0 0
    %125 = vmatpush2.bf16.msra.mxu0 0
    %126 = vmatprep.subr.bf16.mxu0 0
    %127 = vmatpush2.bf16.msra.mxu0 0
    %128 = vmatprep.subr.bf16.mxu0 0
    %129 = vmatpush2.bf16.msra.mxu0 0
    %130 = vmatprep.subr.bf16.mxu0 0
    %131 = vmatpush2.bf16.msra.mxu0 0
    %132 = vmatprep.subr.bf16.mxu0 0
    %133 = vmatpush2.bf16.msra.mxu0 0
    %134 = vmatprep.subr.bf16.mxu0 0
    %135 = vmatpush2.bf16.msra.mxu0 0
    %136 = vmatprep.subr.bf16.mxu0 0
    %137 = vmatpush2.bf16.msra.mxu0 0
    %138 = vmatprep.subr.bf16.mxu0 0
    %139 = vmatpush2.bf16.msra.mxu0 0
    %140 = vmatprep.mubr.bf16.mxu0 0
    %141 = vmatmul.mubr.bf16.gmra.mxu0 %v102
    %v142 = vpop.f32.mrf.mxu0
    %v143 = vadd.f32 %v93, %v142
    %v144 = vpop.f32.mrf.mxu0
    %v145 = vpop.f32.mrf.mxu0
    %v146 = vadd.f32 %v93, %v145
    %v147 = vpop.f32.mrf.mxu0
    %148 = vdwg.mxu0
    %v149 = vmax.f32 %v143, 0.0
    %v150 = vmax.f32 %v146, 0.0
    %v151 = vpack.c.bf16 %v150, %v149
    %v152 = vld [vmem:[#allocation7] sm:$0xf]
    %v153 = vld [vmem:[#allocation7 + $0x4] sm:$0xf]
    %v154 = vld [vmem:[#allocation7 + $0x8] sm:$0xf]
    %v155 = vld [vmem:[#allocation7 + $0xc] sm:$0xf]
    %v156 = vld [vmem:[#allocation7 + $0x10] sm:$0xf]
    %v157 = vld [vmem:[#allocation7 + $0x14] sm:$0xf]
    %v158 = vld [vmem:[#allocation7 + $0x18] sm:$0xf]
    %v159 = vld [vmem:[#allocation7 + $0x1c] sm:$0xf]
    %v160 = vld [vmem:[#allocation7 + $0x20] sm:$0xf]
    %v161 = vld [vmem:[#allocation7 + $0x24] sm:$0xf]
    %v162 = vld [vmem:[#allocation7 + $0x28] sm:$0xf]
    %v163 = vld [vmem:[#allocation7 + $0x2c] sm:$0xf]
    %v164 = vld [vmem:[#allocation7 + $0x30] sm:$0xf]
    %v165 = vld [vmem:[#allocation7 + $0x34] sm:$0xf]
    %v166 = vld [vmem:[#allocation7 + $0x38] sm:$0xf]
    %v167 = vld [vmem:[#allocation7 + $0x3c] sm:$0xf]
    %v168 = vld [vmem:[%s4] sm:$0x1]
    %v170 = vlaneseq
    %v171 = vshrl.u32 %v170, 7
    %v172 = vsub.s32 0, %v171
    %v173 = vrot.slane %v168, %v172
    %v191 = vunpack.c.l.b16 %v152
    %v192 = vunpack.c.l.b16 %v153
    %v193 = vunpack.c.l.b16 %v154
    %v194 = vunpack.c.l.b16 %v155
    %v195 = vunpack.c.l.b16 %v156
    %v196 = vunpack.c.l.b16 %v157
    %v197 = vunpack.c.l.b16 %v158
    %v198 = vunpack.c.l.b16 %v159
    %v199 = vunpack.c.l.b16 %v160
    %v200 = vunpack.c.l.b16 %v161
    %v201 = vunpack.c.l.b16 %v162
    %v202 = vunpack.c.l.b16 %v163
    %v203 = vunpack.c.l.b16 %v164
    %v204 = vunpack.c.l.b16 %v165
    %v205 = vunpack.c.l.b16 %v166
    %v206 = vunpack.c.l.b16 %v167
    %v207 = vpack.c.b16 %v192, %v191
    %v208 = vpack.c.b16 %v194, %v193
    %v209 = vpack.c.b16 %v196, %v195
    %v210 = vpack.c.b16 %v198, %v197
    %v211 = vpack.c.b16 %v200, %v199
    %v212 = vpack.c.b16 %v202, %v201
    %v213 = vpack.c.b16 %v204, %v203
    %v214 = vpack.c.b16 %v206, %v205
    %223 = vmatprep.subr.bf16.mxu0 0
    %224 = vmatpush1.bf16.msra.mxu0 %v214
    %225 = vmatprep.subr.bf16.mxu0 0
    %226 = vmatpush1.bf16.msra.mxu0 %v213
    %227 = vmatprep.subr.bf16.mxu0 0
    %228 = vmatpush1.bf16.msra.mxu0 %v212
    %229 = vmatprep.subr.bf16.mxu0 0
    %230 = vmatpush1.bf16.msra.mxu0 %v211
    %231 = vmatprep.subr.bf16.mxu0 0
    %232 = vmatpush1.bf16.msra.mxu0 %v210
    %233 = vmatprep.subr.bf16.mxu0 0
    %234 = vmatpush1.bf16.msra.mxu0 %v209
    %235 = vmatprep.subr.bf16.mxu0 0
    %236 = vmatpush1.bf16.msra.mxu0 %v208
    %237 = vmatprep.subr.bf16.mxu0 0
    %238 = vmatpush1.bf16.msra.mxu0 %v207
    %239 = vmatprep.subr.bf16.mxu0 0
    %240 = vmatpush2.bf16.msra.mxu0 0
    %241 = vmatprep.subr.bf16.mxu0 0
    %242 = vmatpush2.bf16.msra.mxu0 0
    %243 = vmatprep.subr.bf16.mxu0 0
    %244 = vmatpush2.bf16.msra.mxu0 0
    %245 = vmatprep.subr.bf16.mxu0 0
    %246 = vmatpush2.bf16.msra.mxu0 0
    %247 = vmatprep.subr.bf16.mxu0 0
    %248 = vmatpush2.bf16.msra.mxu0 0
    %249 = vmatprep.subr.bf16.mxu0 0
    %250 = vmatpush2.bf16.msra.mxu0 0
    %251 = vmatprep.subr.bf16.mxu0 0
    %252 = vmatpush2.bf16.msra.mxu0 0
    %253 = vmatprep.subr.bf16.mxu0 0
    %254 = vmatpush2.bf16.msra.mxu0 0
    %255 = vmatprep.mubr.bf16.mxu0 0
    %256 = vmatmul.mubr.bf16.gmra.mxu0 %v151
    %v257 = vpop.f32.mrf.mxu0
    %v258 = vadd.f32 %v173, %v257
    %v259 = vpop.f32.mrf.mxu0
    %v260 = vpop.f32.mrf.mxu0
    %v261 = vadd.f32 %v173, %v260
    %v262 = vpop.f32.mrf.mxu0
    %263 = vdwg.mxu0
    %v264 = vmax.f32 %v258, 0.0
    %v265 = vmax.f32 %v261, 0.0
    %v266 = vpack.c.bf16 %v265, %v264
    %v267 = vld [vmem:[#allocation8] sm:$0xf]
    %v268 = vld [vmem:[#allocation8 + $0x4] sm:$0xf]
    %v269 = vld [vmem:[#allocation8 + $0x8] sm:$0xf]
    %v270 = vld [vmem:[#allocation8 + $0xc] sm:$0xf]
    %v271 = vld [vmem:[#allocation8 + $0x10] sm:$0xf]
    %v272 = vld [vmem:[#allocation8 + $0x14] sm:$0xf]
    %v273 = vld [vmem:[#allocation8 + $0x18] sm:$0xf]
    %v274 = vld [vmem:[#allocation8 + $0x1c] sm:$0xf]
    %v275 = vld [vmem:[#allocation8 + $0x20] sm:$0xf]
    %v276 = vld [vmem:[#allocation8 + $0x24] sm:$0xf]
    %v277 = vld [vmem:[#allocation8 + $0x28] sm:$0xf]
    %v278 = vld [vmem:[#allocation8 + $0x2c] sm:$0xf]
    %v279 = vld [vmem:[#allocation8 + $0x30] sm:$0xf]
    %v280 = vld [vmem:[#allocation8 + $0x34] sm:$0xf]
    %v281 = vld [vmem:[#allocation8 + $0x38] sm:$0xf]
    %v282 = vld [vmem:[#allocation8 + $0x3c] sm:$0xf]
    %v283 = vld [vmem:[%s6] sm:$0x1]
    %v285 = vlaneseq
    %v286 = vshrl.u32 %v285, 7
    %v287 = vsub.s32 0, %v286
    %v288 = vrot.slane %v283, %v287
    %v306 = vunpack.c.l.b16 %v267
    %v307 = vunpack.c.l.b16 %v268
    %v308 = vunpack.c.l.b16 %v269
    %v309 = vunpack.c.l.b16 %v270
    %v310 = vunpack.c.l.b16 %v271
    %v311 = vunpack.c.l.b16 %v272
    %v312 = vunpack.c.l.b16 %v273
    %v313 = vunpack.c.l.b16 %v274
    %v314 = vunpack.c.l.b16 %v275
    %v315 = vunpack.c.l.b16 %v276
    %v316 = vunpack.c.l.b16 %v277
    %v317 = vunpack.c.l.b16 %v278
    %v318 = vunpack.c.l.b16 %v279
    %v319 = vunpack.c.l.b16 %v280
    %v320 = vunpack.c.l.b16 %v281
    %v321 = vunpack.c.l.b16 %v282
    %v322 = vpack.c.b16 %v307, %v306
    %v323 = vpack.c.b16 %v309, %v308
    %v324 = vpack.c.b16 %v311, %v310
    %v325 = vpack.c.b16 %v313, %v312
    %v326 = vpack.c.b16 %v315, %v314
    %v327 = vpack.c.b16 %v317, %v316
    %v328 = vpack.c.b16 %v319, %v318
    %v329 = vpack.c.b16 %v321, %v320
    %338 = vmatprep.subr.bf16.mxu0 0
    %339 = vmatpush1.bf16.msra.mxu0 %v329
    %340 = vmatprep.subr.bf16.mxu0 0
    %341 = vmatpush1.bf16.msra.mxu0 %v328
    %342 = vmatprep.subr.bf16.mxu0 0
    %343 = vmatpush1.bf16.msra.mxu0 %v327
    %344 = vmatprep.subr.bf16.mxu0 0
    %345 = vmatpush1.bf16.msra.mxu0 %v326
    %346 = vmatprep.subr.bf16.mxu0 0
    %347 = vmatpush1.bf16.msra.mxu0 %v325
    %348 = vmatprep.subr.bf16.mxu0 0
    %349 = vmatpush1.bf16.msra.mxu0 %v324
    %350 = vmatprep.subr.bf16.mxu0 0
    %351 = vmatpush1.bf16.msra.mxu0 %v323
    %352 = vmatprep.subr.bf16.mxu0 0
    %353 = vmatpush1.bf16.msra.mxu0 %v322
    %354 = vmatprep.subr.bf16.mxu0 0
    %355 = vmatpush2.bf16.msra.mxu0 0
    %356 = vmatprep.subr.bf16.mxu0 0
    %357 = vmatpush2.bf16.msra.mxu0 0
    %358 = vmatprep.subr.bf16.mxu0 0
    %359 = vmatpush2.bf16.msra.mxu0 0
    %360 = vmatprep.subr.bf16.mxu0 0
    %361 = vmatpush2.bf16.msra.mxu0 0
    %362 = vmatprep.subr.bf16.mxu0 0
    %363 = vmatpush2.bf16.msra.mxu0 0
    %364 = vmatprep.subr.bf16.mxu0 0
    %365 = vmatpush2.bf16.msra.mxu0 0
    %366 = vmatprep.subr.bf16.mxu0 0
    %367 = vmatpush2.bf16.msra.mxu0 0
    %368 = vmatprep.subr.bf16.mxu0 0
    %369 = vmatpush2.bf16.msra.mxu0 0
    %370 = vmatprep.mubr.bf16.mxu0 0
    %371 = vmatmul.mubr.bf16.gmra.mxu0 %v266
    %v372 = vpop.f32.mrf.mxu0
    %v373 = vadd.f32 %v288, %v372
    %v374 = vpop.f32.mrf.mxu0
    %v375 = vpop.f32.mrf.mxu0
    %v376 = vadd.f32 %v288, %v375
    %v377 = vpop.f32.mrf.mxu0
    %378 = vdwg.mxu0
    %379 = vst [vmem:[#allocation10] sm:$0xff] %v373
    %380 = vst [vmem:[#allocation10 + $0x8] sm:$0xff] %v376
    // Predicated region
    $region46: #{tpu_custom_call.1} parent=1 // pred_check
      _
    $region47: #{tpu_custom_call.1} parent=1 // pred_check_branch
      %382 = sbr.rel (0) target = $region49
    $region48: #{tpu_custom_call.1} parent=1 // pred_region
      %s384 = ssub.s32 256, 256
      %385 = vsyncadd [#allocation4], %s384
      %s386 = sshll.u32 [#allocation10], 4
      %s387 = int_to_ptr.vmem [resolvable:$true] %s386
      %392 = dma.vmem_to_hbm [thread:$0]  %s387, 256, %s7, [#allocation4], 128, 128, 8
    $region49: #{tpu_custom_call.1} parent=1 // pred_fallthru
      _
    // Predicated region
    $region50: #{tpu_custom_call.1} parent=1 // pred_check
      _
    $region51: #{tpu_custom_call.1} parent=1 // pred_check_branch
      %394 = sbr.rel (0) target = $region53
    $region52: #{tpu_custom_call.1} parent=1 // pred_region
      %395 = dma.done [#allocation4], 256
    $region53: #{tpu_custom_call.1} parent=1 // pred_fallthru
      _
    %396 = vsyncpa [#allocation3], 1
    %397 = vsyncpa [#allocation6], 1
    %398 = vsyncpa [#allocation9], 1
    %399 = vsyncpa [#allocation4], 1

</llo_original>
